<compile_context>
chip_gen: v6e
topology: v6e:2x2x1
jax: 0.10.0
libtpu: 0.0.40
codegen_flags: <defaults>
</compile_context>

<pallas_src>
import jax
import jax.numpy as jnp
from jax.experimental import pallas as pl
from jax.experimental.pallas import tpu as pltpu


# --------------------------------------------------------------------------
# Kernel: one batch tile (block_b batch elements == rows = block_b*S).
# --------------------------------------------------------------------------
def _bmha_kernel(x_ref, wqkv_ref, bqkv_ref, wo_ref, bo_ref, bias_ref,
                 out_ref, ocat_ref):
    rows, E = x_ref.shape               # rows = block_b * S
    H, S, _ = bias_ref.shape
    hd = E // H
    Bt = rows // S

    # ---- fused QKV projection: one lane-dense [E, 3E] MXU matmul ----------
    # (1/sqrt(head_dim) is already folded into the Q columns of wqkv/bqkv.)
    qkv = jnp.dot(x_ref[...], wqkv_ref[...],
                  preferred_element_type=jnp.float32) + bqkv_ref[...]    # f32 [rows, 3E]

    # ---- head-major batching: [H*Bt, S, hd] in bf16 ------------------------
    # Each per-head slice is cast to bf16 immediately so the f32 qkv tensor
    # does not stay live past this point (bounds vreg/VMEM live ranges).
    def gather_heads(base):
        parts = [
            qkv[:, base + h * hd: base + (h + 1) * hd]
            .astype(jnp.bfloat16)
            .reshape(1, Bt, S, hd)
            for h in range(H)
        ]
        return jnp.concatenate(parts, axis=0).reshape(H * Bt, S, hd)

    q = gather_heads(0)
    k = gather_heads(E)
    v = gather_heads(2 * E)

    # ---- ONE batched scores matmul over all heads, ONE bias add, ONE softmax
    s = jnp.einsum('bqd,bkd->bqk', q, k,
                   preferred_element_type=jnp.float32)                   # [H*Bt, S, S]
    s = s.reshape(H, Bt, S, S) + bias_ref[...].astype(jnp.float32)[:, None, :, :]

    m = jnp.max(s, axis=-1, keepdims=True)
    e = jnp.exp(s - m)
    p = e * pl.reciprocal(jnp.sum(e, axis=-1, keepdims=True), approx=True)
    p = p.astype(jnp.bfloat16).reshape(H * Bt, S, S)

    # ---- ONE batched PV matmul over all heads -------------------------------
    o = jnp.einsum('bqk,bkd->bqd', p, v,
                   preferred_element_type=jnp.float32)                   # [H*Bt, S, hd]
    o = o.reshape(H, Bt, S, hd)

    # ---- re-pack heads onto the lane axis (VMEM scratch), then a SINGLE
    #      output projection with K = E (replaces H K=hd matmuls + adds) -----
    for h in range(H):
        ocat_ref[:, h * hd:(h + 1) * hd] = (
            o[h].reshape(rows, hd).astype(jnp.bfloat16))

    out = jnp.dot(ocat_ref[...], wo_ref[...],
                  preferred_element_type=jnp.float32) + bo_ref[...]
    out_ref[...] = out.astype(out_ref.dtype)


# --------------------------------------------------------------------------
# Wrapper
# --------------------------------------------------------------------------
def _vmem_capacity_bytes():
    try:
        return int(pltpu.get_tpu_info().vmem_capacity_bytes)
    except Exception:
        return 64 * 1024 * 1024        # conservative default (v7x per-core VMEM)


def biased_multihead_attention(x, params, *, num_heads, bias_factor=0.1,
                               relative_pos=None, attn_mask=None, block_b=None):
    B, S, E = x.shape
    H = num_heads
    assert E % H == 0, "embed_dim must be divisible by num_heads"
    hd = E // H
    scale = 1.0 / (float(hd) ** 0.5)
    MiB = 1024 * 1024

    # --- fold relative-position bias and mask into ONE bf16 tensor (halves
    #     the largest resident tensor in HBM traffic and VMEM)
    bias = jnp.zeros((H, S, S), jnp.float32)
    if relative_pos is not None:
        bias = bias + bias_factor * jnp.transpose(
            relative_pos.astype(jnp.float32), (2, 0, 1))                 # [H, S, S]
    if attn_mask is not None:
        bias = bias + attn_mask.astype(jnp.float32)[None, :, :]
    bias = bias.astype(jnp.bfloat16)

    # --- fused QKV weights, 1/sqrt(hd) folded into the Q columns -----------
    wq = params["wq"].astype(jnp.float32) * scale
    bq = params["bq"].astype(jnp.float32) * scale
    wqkv = jnp.concatenate([wq, params["wk"], params["wv"]],
                           axis=1).astype(jnp.bfloat16)                  # [E, 3E]
    bqkv = jnp.concatenate([bq, params["bk"], params["bv"]],
                           axis=1).astype(jnp.float32)                   # [1, 3E]
    wo = params["wo"].astype(jnp.bfloat16)                               # [E, E]
    bo = params["bo"].astype(jnp.float32)                                # [1, E]

    # --- generation-aware VMEM budget ---------------------------------------
    vmem_cap = _vmem_capacity_bytes()
    vmem_budget = max(16 * MiB, min(int(0.75 * vmem_cap), vmem_cap - 8 * MiB))

    const_bytes = 2 * (wqkv.size * 2 + bqkv.size * 4 + wo.size * 2
                       + bo.size * 4 + bias.size * 2)    # double-buffered constants

    def step_bytes(d):
        rows = d * S
        io = rows * E * 2 * 2 * 2                        # x + out, bf16, double-buffered
        interm = (rows * 3 * E * 4          # qkv f32
                  + 3 * rows * E * 2        # q/k/v bf16
                  + 3 * d * H * S * S * 4   # scores / exp / probs f32
                  + d * H * S * S * 2       # probs bf16
                  + d * H * S * hd * 4      # attention output f32
                  + rows * E * 2            # ocat scratch (bf16)
                  + rows * E * 4)           # projection output f32
        return const_bytes + io + interm

    # --- batch tile: sublane-aligned rows, fits the VMEM budget, grid >= 2 --
    if block_b is None:
        valid = [d for d in range(1, B + 1)
                 if B % d == 0 and ((d * S) % 8 == 0 or d == B)]
        fitting = [d for d in valid if step_bytes(d) <= int(0.8 * vmem_budget)]
        pool = fitting if fitting else valid[:1]

        def _key(d):
            rows = d * S
            grid = B // d
            # prefer grid >= 2 (v7x megacore), then rows up to ~1024, then smaller
            return (grid >= 2, min(rows, 1024), -rows)

        block_b = max(pool, key=_key)
    assert B % block_b == 0
    rows = block_b * S
    assert rows % 8 == 0 or block_b == B, "block rows must be sublane-aligned"
    grid = (B // block_b,)

    vmem_limit = int(min(vmem_budget, max(2 * step_bytes(block_b), 32 * MiB)))

    # fold (B, S) -> rows so the kernel's matmuls see a tall M dimension
    x2 = x.reshape(B * S, E).astype(jnp.bfloat16)

    # --- advisory cost estimate for XLA scheduling around the call ----------
    flops = int(2 * B * S * E * 3 * E            # QKV projection
                + 4 * B * H * S * S * hd         # scores + PV
                + 2 * B * S * E * E)             # output projection
    bytes_accessed = int(x2.size * 2 + B * S * E * 2
                         + grid[0] * (wqkv.size * 2 + bqkv.size * 4
                                      + wo.size * 2 + bo.size * 4 + bias.size * 2))
    cost = pl.CostEstimate(flops=flops, transcendentals=int(B * H * S * S),
                           bytes_accessed=bytes_accessed)

    out = pl.pallas_call(
        _bmha_kernel,
        out_shape=jax.ShapeDtypeStruct((B * S, E), jnp.bfloat16),        # bf16 writeback
        grid=grid,
        in_specs=[
            pl.BlockSpec((rows, E), lambda i: (i, 0)),       # x rows (batch tile)
            pl.BlockSpec(wqkv.shape, lambda i: (0, 0)),      # fused W_qkv (scale folded)
            pl.BlockSpec(bqkv.shape, lambda i: (0, 0)),      # fused b_qkv
            pl.BlockSpec(wo.shape, lambda i: (0, 0)),        # W_o
            pl.BlockSpec(bo.shape, lambda i: (0, 0)),        # b_o
            pl.BlockSpec(bias.shape, lambda i: (0, 0, 0)),   # [H, S, S] bf16 bias
        ],
        out_specs=pl.BlockSpec((rows, E), lambda i: (i, 0)),
        scratch_shapes=[pltpu.VMEM((rows, E), jnp.bfloat16)],   # head re-pack buffer
        compiler_params=pltpu.CompilerParams(
            dimension_semantics=("parallel",),
            vmem_limit_bytes=vmem_limit,
        ),
        cost_estimate=cost,
    )(x2, wqkv, bqkv, wo, bo, bias)

    return out.reshape(B, S, E)


# --------------------------------------------------------------------------
# Parameters + pure-JAX reference (mirrors the PyTorch forward, all f32)
# --------------------------------------------------------------------------
def make_params(key, embed_dim):
    ks = jax.random.split(key, 4)

    def lin(k, din, dout):
        k1, k2 = jax.random.split(k)
        w = jax.random.normal(k1, (din, dout), jnp.float32) * 0.05
        b = jax.random.normal(k2, (1, dout), jnp.float32) * 0.05
        return w, b

    p = {}
    p["wq"], p["bq"] = lin(ks[0], embed_dim, embed_dim)
    p["wk"], p["bk"] = lin(ks[1], embed_dim, embed_dim)
    p["wv"], p["bv"] = lin(ks[2], embed_dim, embed_dim)
    p["wo"], p["bo"] = lin(ks[3], embed_dim, embed_dim)
    return p


def _reference(x, p, *, num_heads, bias_factor, relative_pos=None, attn_mask=None):
    B, S, E = x.shape
    hd = E // num_heads
    q = (x @ p["wq"] + p["bq"]).reshape(B, S, num_heads, hd).transpose(0, 2, 1, 3)
    k = (x @ p["wk"] + p["bk"]).reshape(B, S, num_heads, hd).transpose(0, 2, 1, 3)
    v = (x @ p["wv"] + p["bv"]).reshape(B, S, num_heads, hd).transpose(0, 2, 1, 3)
    s = jnp.einsum('bhqd,bhkd->bhqk', q, k) / jnp.sqrt(float(hd))
    if relative_pos is not None:
        s = s + bias_factor * jnp.transpose(relative_pos, (2, 0, 1))[None]
    if attn_mask is not None:
        s = s + attn_mask[None, None]
    w = jax.nn.softmax(s, axis=-1)
    o = jnp.einsum('bhqk,bhkd->bhqd', w, v).transpose(0, 2, 1, 3).reshape(B, S, E)
    return o @ p["wo"] + p["bo"]


# --------------------------------------------------------------------------
if __name__ == "__main__":
    B, S, E, H = 2, 8, 32, 4
    BIAS_FACTOR = 0.1

    key = jax.random.PRNGKey(0)
    kx, kr, kp = jax.random.split(key, 3)
    x = jax.random.normal(kx, (B, S, E), jnp.float32)
    relative_pos = jax.random.normal(kr, (S, S, H), jnp.float32)
    # additive causal mask, same convention as the torch attn_mask argument
    attn_mask = jnp.where(jnp.arange(S)[None, :] <= jnp.arange(S)[:, None],
                          0.0, -1e9).astype(jnp.float32)

    params = make_params(kp, E)

    out = biased_multihead_attention(
        x, params, num_heads=H, bias_factor=BIAS_FACTOR,
        relative_pos=relative_pos, attn_mask=attn_mask)
    out = jax.block_until_ready(out)

    assert out.shape == (B, S, E)
    assert bool(jnp.all(jnp.isfinite(out.astype(jnp.float32))))

    ref = _reference(x, params, num_heads=H, bias_factor=BIAS_FACTOR,
                     relative_pos=relative_pos, attn_mask=attn_mask)
    max_err = float(jnp.max(jnp.abs(out.astype(jnp.float32) - ref)))
    assert max_err < 5e-2, f"max abs error vs reference: {max_err}"

    print("KERNEL_OK")
</pallas_src>

<mosaic_0001>
module attributes {stable_mosaic.version = 11 : i64} {
  func.func @_bmha_kernel(%arg0: i32, %arg1: memref<8x32xbf16, #tpu.memory_space<vmem>>, %arg2: memref<32x96xbf16, #tpu.memory_space<vmem>>, %arg3: memref<1x96xf32, #tpu.memory_space<vmem>>, %arg4: memref<32x32xbf16, #tpu.memory_space<vmem>>, %arg5: memref<1x32xf32, #tpu.memory_space<vmem>>, %arg6: memref<4x8x8xbf16, #tpu.memory_space<vmem>>, %arg7: memref<8x32xbf16, #tpu.memory_space<vmem>>, %arg8: memref<8x32xbf16, #tpu.memory_space<vmem>>) attributes {dimension_semantics = [#tpu.dimension_semantics<parallel>], iteration_bounds = array<i64: 2>, scalar_prefetch = 0 : i64, scratch_operands = 1 : i64, tpu.core_type = #tpu.core_type<tc>, window_params = [{transform_indices = @transform_0, window_bounds = array<i64: 8, 32>}, {pipeline_mode = #tpu.pipeline_mode<synchronous>, transform_indices = @transform_1, window_bounds = array<i64: 32, 96>}, {pipeline_mode = #tpu.pipeline_mode<synchronous>, transform_indices = @transform_2, window_bounds = array<i64: 1, 96>}, {pipeline_mode = #tpu.pipeline_mode<synchronous>, transform_indices = @transform_3, window_bounds = array<i64: 32, 32>}, {pipeline_mode = #tpu.pipeline_mode<synchronous>, transform_indices = @transform_4, window_bounds = array<i64: 1, 32>}, {pipeline_mode = #tpu.pipeline_mode<synchronous>, transform_indices = @transform_5, window_bounds = array<i64: 4, 8, 8>}, {transform_indices = @transform_6, window_bounds = array<i64: 8, 32>}]} {
    %c0 = arith.constant 0 : index
    %c0_0 = arith.constant 0 : index
    %0 = vector.load %arg1[%c0, %c0_0] : memref<8x32xbf16, #tpu.memory_space<vmem>>, vector<8x32xbf16>
    %c0_1 = arith.constant 0 : index
    %c0_2 = arith.constant 0 : index
    %1 = vector.load %arg2[%c0_1, %c0_2] : memref<32x96xbf16, #tpu.memory_space<vmem>>, vector<32x96xbf16>
    %cst = arith.constant dense<0.000000e+00> : vector<8x96xf32>
    %2 = tpu.matmul %0, %1, %cst {dimension_numbers = #tpu.dot_dimension_numbers<[1], [0], [0], [1], [0, 0, 1, 1], [], []>} : vector<8x32xbf16>, vector<32x96xbf16>, vector<8x96xf32> -> vector<8x96xf32>
    %c0_3 = arith.constant 0 : index
    %c0_4 = arith.constant 0 : index
    %3 = vector.load %arg3[%c0_3, %c0_4] : memref<1x96xf32, #tpu.memory_space<vmem>>, vector<1x96xf32>
    %4 = vector.broadcast %3 : vector<1x96xf32> to vector<8x96xf32>
    %5 = arith.addf %2, %4 : vector<8x96xf32>
    %6 = vector.extract_strided_slice %5 {offsets = [0, 0], sizes = [8, 8], strides = [1, 1]} : vector<8x96xf32> to vector<8x8xf32>
    %7 = arith.truncf %6 : vector<8x8xf32> to vector<8x8xbf16>
    %8 = vector.shape_cast %7 : vector<8x8xbf16> to vector<1x1x8x8xbf16>
    %9 = vector.extract_strided_slice %5 {offsets = [0, 8], sizes = [8, 8], strides = [1, 1]} : vector<8x96xf32> to vector<8x8xf32>
    %10 = arith.truncf %9 : vector<8x8xf32> to vector<8x8xbf16>
    %11 = vector.shape_cast %10 : vector<8x8xbf16> to vector<1x1x8x8xbf16>
    %12 = vector.extract_strided_slice %5 {offsets = [0, 16], sizes = [8, 8], strides = [1, 1]} : vector<8x96xf32> to vector<8x8xf32>
    %13 = arith.truncf %12 : vector<8x8xf32> to vector<8x8xbf16>
    %14 = vector.shape_cast %13 : vector<8x8xbf16> to vector<1x1x8x8xbf16>
    %15 = vector.extract_strided_slice %5 {offsets = [0, 24], sizes = [8, 8], strides = [1, 1]} : vector<8x96xf32> to vector<8x8xf32>
    %16 = arith.truncf %15 : vector<8x8xf32> to vector<8x8xbf16>
    %17 = vector.shape_cast %16 : vector<8x8xbf16> to vector<1x1x8x8xbf16>
    %18 = tpu.concatenate %8, %11, %14, %17 in 0 : vector<1x1x8x8xbf16>, vector<1x1x8x8xbf16>, vector<1x1x8x8xbf16>, vector<1x1x8x8xbf16> -> vector<4x1x8x8xbf16>
    %19 = vector.shape_cast %18 : vector<4x1x8x8xbf16> to vector<4x8x8xbf16>
    %20 = vector.extract_strided_slice %5 {offsets = [0, 32], sizes = [8, 8], strides = [1, 1]} : vector<8x96xf32> to vector<8x8xf32>
    %21 = arith.truncf %20 : vector<8x8xf32> to vector<8x8xbf16>
    %22 = vector.shape_cast %21 : vector<8x8xbf16> to vector<1x1x8x8xbf16>
    %23 = vector.extract_strided_slice %5 {offsets = [0, 40], sizes = [8, 8], strides = [1, 1]} : vector<8x96xf32> to vector<8x8xf32>
    %24 = arith.truncf %23 : vector<8x8xf32> to vector<8x8xbf16>
    %25 = vector.shape_cast %24 : vector<8x8xbf16> to vector<1x1x8x8xbf16>
    %26 = vector.extract_strided_slice %5 {offsets = [0, 48], sizes = [8, 8], strides = [1, 1]} : vector<8x96xf32> to vector<8x8xf32>
    %27 = arith.truncf %26 : vector<8x8xf32> to vector<8x8xbf16>
    %28 = vector.shape_cast %27 : vector<8x8xbf16> to vector<1x1x8x8xbf16>
    %29 = vector.extract_strided_slice %5 {offsets = [0, 56], sizes = [8, 8], strides = [1, 1]} : vector<8x96xf32> to vector<8x8xf32>
    %30 = arith.truncf %29 : vector<8x8xf32> to vector<8x8xbf16>
    %31 = vector.shape_cast %30 : vector<8x8xbf16> to vector<1x1x8x8xbf16>
    %32 = tpu.concatenate %22, %25, %28, %31 in 0 : vector<1x1x8x8xbf16>, vector<1x1x8x8xbf16>, vector<1x1x8x8xbf16>, vector<1x1x8x8xbf16> -> vector<4x1x8x8xbf16>
    %33 = vector.shape_cast %32 : vector<4x1x8x8xbf16> to vector<4x8x8xbf16>
    %34 = vector.extract_strided_slice %5 {offsets = [0, 64], sizes = [8, 8], strides = [1, 1]} : vector<8x96xf32> to vector<8x8xf32>
    %35 = arith.truncf %34 : vector<8x8xf32> to vector<8x8xbf16>
    %36 = vector.shape_cast %35 : vector<8x8xbf16> to vector<1x1x8x8xbf16>
    %37 = vector.extract_strided_slice %5 {offsets = [0, 72], sizes = [8, 8], strides = [1, 1]} : vector<8x96xf32> to vector<8x8xf32>
    %38 = arith.truncf %37 : vector<8x8xf32> to vector<8x8xbf16>
    %39 = vector.shape_cast %38 : vector<8x8xbf16> to vector<1x1x8x8xbf16>
    %40 = vector.extract_strided_slice %5 {offsets = [0, 80], sizes = [8, 8], strides = [1, 1]} : vector<8x96xf32> to vector<8x8xf32>
    %41 = arith.truncf %40 : vector<8x8xf32> to vector<8x8xbf16>
    %42 = vector.shape_cast %41 : vector<8x8xbf16> to vector<1x1x8x8xbf16>
    %43 = vector.extract_strided_slice %5 {offsets = [0, 88], sizes = [8, 8], strides = [1, 1]} : vector<8x96xf32> to vector<8x8xf32>
    %44 = arith.truncf %43 : vector<8x8xf32> to vector<8x8xbf16>
    %45 = vector.shape_cast %44 : vector<8x8xbf16> to vector<1x1x8x8xbf16>
    %46 = tpu.concatenate %36, %39, %42, %45 in 0 : vector<1x1x8x8xbf16>, vector<1x1x8x8xbf16>, vector<1x1x8x8xbf16>, vector<1x1x8x8xbf16> -> vector<4x1x8x8xbf16>
    %47 = vector.shape_cast %46 : vector<4x1x8x8xbf16> to vector<4x8x8xbf16>
    "tpu.trace_start"() <{level = 10 : i32, message = "bqd,bkd->bqk"}> : () -> ()
    %cst_5 = arith.constant dense<0.000000e+00> : vector<4x8x8xf32>
    %48 = tpu.matmul %19, %33, %cst_5 {dimension_numbers = #tpu.dot_dimension_numbers<[2], [2], [1], [1], [0, 0, 0, 1, 1, 1], [0], [0]>} : vector<4x8x8xbf16>, vector<4x8x8xbf16>, vector<4x8x8xf32> -> vector<4x8x8xf32>
    "tpu.trace_stop"() : () -> ()
    %49 = vector.shape_cast %48 : vector<4x8x8xf32> to vector<4x1x8x8xf32>
    %c0_6 = arith.constant 0 : index
    %c0_7 = arith.constant 0 : index
    %c0_8 = arith.constant 0 : index
    %50 = vector.load %arg6[%c0_6, %c0_7, %c0_8] : memref<4x8x8xbf16, #tpu.memory_space<vmem>>, vector<4x8x8xbf16>
    %51 = arith.extf %50 : vector<4x8x8xbf16> to vector<4x8x8xf32>
    %52 = vector.shape_cast %51 : vector<4x8x8xf32> to vector<4x1x8x8xf32>
    %53 = arith.addf %49, %52 : vector<4x1x8x8xf32>
    %cst_9 = arith.constant dense<0xFF800000> : vector<4x1x8xf32>
    %54 = vector.multi_reduction <maximumf>, %53, %cst_9 [3] : vector<4x1x8x8xf32> to vector<4x1x8xf32>
    %55 = vector.shape_cast %54 : vector<4x1x8xf32> to vector<4x1x8x1xf32>
    %56 = vector.broadcast %55 : vector<4x1x8x1xf32> to vector<4x1x8x8xf32>
    %57 = arith.subf %53, %56 : vector<4x1x8x8xf32>
    %58 = math.exp %57 : vector<4x1x8x8xf32>
    %cst_10 = arith.constant dense<0.000000e+00> : vector<4x1x8xf32>
    %59 = vector.multi_reduction <add>, %58, %cst_10 [3] : vector<4x1x8x8xf32> to vector<4x1x8xf32>
    %60 = vector.shape_cast %59 : vector<4x1x8xf32> to vector<4x1x8x1xf32>
    %61 = tpu.reciprocal %60 {approx = true} : vector<4x1x8x1xf32> -> vector<4x1x8x1xf32>
    %62 = vector.broadcast %61 : vector<4x1x8x1xf32> to vector<4x1x8x8xf32>
    %63 = arith.mulf %58, %62 : vector<4x1x8x8xf32>
    %64 = arith.truncf %63 : vector<4x1x8x8xf32> to vector<4x1x8x8xbf16>
    %65 = vector.shape_cast %64 : vector<4x1x8x8xbf16> to vector<4x8x8xbf16>
    "tpu.trace_start"() <{level = 10 : i32, message = "bqk,bkd->bqd"}> : () -> ()
    %cst_11 = arith.constant dense<0.000000e+00> : vector<4x8x8xf32>
    %66 = tpu.matmul %65, %47, %cst_11 {dimension_numbers = #tpu.dot_dimension_numbers<[2], [1], [1], [2], [0, 0, 0, 1, 1, 2], [0], [0]>} : vector<4x8x8xbf16>, vector<4x8x8xbf16>, vector<4x8x8xf32> -> vector<4x8x8xf32>
    "tpu.trace_stop"() : () -> ()
    %67 = vector.shape_cast %66 : vector<4x8x8xf32> to vector<4x1x8x8xf32>
    %68 = vector.extract_strided_slice %67 {offsets = [0, 0, 0, 0], sizes = [1, 1, 8, 8], strides = [1, 1, 1, 1]} : vector<4x1x8x8xf32> to vector<1x1x8x8xf32>
    %69 = vector.shape_cast %68 : vector<1x1x8x8xf32> to vector<1x8x8xf32>
    %70 = vector.shape_cast %69 : vector<1x8x8xf32> to vector<8x8xf32>
    %71 = arith.truncf %70 : vector<8x8xf32> to vector<8x8xbf16>
    %c0_12 = arith.constant 0 : index
    %c0_13 = arith.constant 0 : index
    %72 = vector.load %arg8[%c0_12, %c0_13] : memref<8x32xbf16, #tpu.memory_space<vmem>>, vector<8x8xbf16>
    tpu.vector_store %arg8[%c0_12, %c0_13], %71 {strides = array<i32>} : memref<8x32xbf16, #tpu.memory_space<vmem>>, vector<8x8xbf16>,
    %73 = vector.extract_strided_slice %67 {offsets = [1, 0, 0, 0], sizes = [1, 1, 8, 8], strides = [1, 1, 1, 1]} : vector<4x1x8x8xf32> to vector<1x1x8x8xf32>
    %74 = vector.shape_cast %73 : vector<1x1x8x8xf32> to vector<1x8x8xf32>
    %75 = vector.shape_cast %74 : vector<1x8x8xf32> to vector<8x8xf32>
    %76 = arith.truncf %75 : vector<8x8xf32> to vector<8x8xbf16>
    %c0_14 = arith.constant 0 : index
    %c8 = arith.constant 8 : index
    %77 = vector.load %arg8[%c0_14, %c8] : memref<8x32xbf16, #tpu.memory_space<vmem>>, vector<8x8xbf16>
    tpu.vector_store %arg8[%c0_14, %c8], %76 {strides = array<i32>} : memref<8x32xbf16, #tpu.memory_space<vmem>>, vector<8x8xbf16>,
    %78 = vector.extract_strided_slice %67 {offsets = [2, 0, 0, 0], sizes = [1, 1, 8, 8], strides = [1, 1, 1, 1]} : vector<4x1x8x8xf32> to vector<1x1x8x8xf32>
    %79 = vector.shape_cast %78 : vector<1x1x8x8xf32> to vector<1x8x8xf32>
    %80 = vector.shape_cast %79 : vector<1x8x8xf32> to vector<8x8xf32>
    %81 = arith.truncf %80 : vector<8x8xf32> to vector<8x8xbf16>
    %c0_15 = arith.constant 0 : index
    %c16 = arith.constant 16 : index
    %82 = vector.load %arg8[%c0_15, %c16] : memref<8x32xbf16, #tpu.memory_space<vmem>>, vector<8x8xbf16>
    tpu.vector_store %arg8[%c0_15, %c16], %81 {strides = array<i32>} : memref<8x32xbf16, #tpu.memory_space<vmem>>, vector<8x8xbf16>,
    %83 = vector.extract_strided_slice %67 {offsets = [3, 0, 0, 0], sizes = [1, 1, 8, 8], strides = [1, 1, 1, 1]} : vector<4x1x8x8xf32> to vector<1x1x8x8xf32>
    %84 = vector.shape_cast %83 : vector<1x1x8x8xf32> to vector<1x8x8xf32>
    %85 = vector.shape_cast %84 : vector<1x8x8xf32> to vector<8x8xf32>
    %86 = arith.truncf %85 : vector<8x8xf32> to vector<8x8xbf16>
    %c0_16 = arith.constant 0 : index
    %c24 = arith.constant 24 : index
    %87 = vector.load %arg8[%c0_16, %c24] : memref<8x32xbf16, #tpu.memory_space<vmem>>, vector<8x8xbf16>
    tpu.vector_store %arg8[%c0_16, %c24], %86 {strides = array<i32>} : memref<8x32xbf16, #tpu.memory_space<vmem>>, vector<8x8xbf16>,
    %c0_17 = arith.constant 0 : index
    %c0_18 = arith.constant 0 : index
    %88 = vector.load %arg8[%c0_17, %c0_18] : memref<8x32xbf16, #tpu.memory_space<vmem>>, vector<8x32xbf16>
    %c0_19 = arith.constant 0 : index
    %c0_20 = arith.constant 0 : index
    %89 = vector.load %arg4[%c0_19, %c0_20] : memref<32x32xbf16, #tpu.memory_space<vmem>>, vector<32x32xbf16>
    %cst_21 = arith.constant dense<0.000000e+00> : vector<8x32xf32>
    %90 = tpu.matmul %88, %89, %cst_21 {dimension_numbers = #tpu.dot_dimension_numbers<[1], [0], [0], [1], [0, 0, 1, 1], [], []>} : vector<8x32xbf16>, vector<32x32xbf16>, vector<8x32xf32> -> vector<8x32xf32>
    %c0_22 = arith.constant 0 : index
    %c0_23 = arith.constant 0 : index
    %91 = vector.load %arg5[%c0_22, %c0_23] : memref<1x32xf32, #tpu.memory_space<vmem>>, vector<1x32xf32>
    %92 = vector.broadcast %91 : vector<1x32xf32> to vector<8x32xf32>
    %93 = arith.addf %90, %92 : vector<8x32xf32>
    %94 = arith.truncf %93 : vector<8x32xf32> to vector<8x32xbf16>
    %c0_24 = arith.constant 0 : index
    %c0_25 = arith.constant 0 : index
    %95 = vector.load %arg7[%c0_24, %c0_25] : memref<8x32xbf16, #tpu.memory_space<vmem>>, vector<8x32xbf16>
    tpu.vector_store %arg7[%c0_24, %c0_25], %94 {strides = array<i32>} : memref<8x32xbf16, #tpu.memory_space<vmem>>, vector<8x32xbf16>,
    return
  }
  func.func @transform_0(%arg0: i32) -> (i32, i32) {
    %c0_i32 = arith.constant 0 : i32
    %c0_i32_0 = arith.constant 0 : i32
    return %arg0, %c0_i32 : i32, i32
  }
  func.func @transform_1(%arg0: i32) -> (i32, i32) {
    %c0_i32 = arith.constant 0 : i32
    %c0_i32_0 = arith.constant 0 : i32
    %c0_i32_1 = arith.constant 0 : i32
    return %c0_i32, %c0_i32_0 : i32, i32
  }
  func.func @transform_2(%arg0: i32) -> (i32, i32) {
    %c0_i32 = arith.constant 0 : i32
    %c0_i32_0 = arith.constant 0 : i32
    %c0_i32_1 = arith.constant 0 : i32
    return %c0_i32, %c0_i32_0 : i32, i32
  }
  func.func @transform_3(%arg0: i32) -> (i32, i32) {
    %c0_i32 = arith.constant 0 : i32
    %c0_i32_0 = arith.constant 0 : i32
    %c0_i32_1 = arith.constant 0 : i32
    return %c0_i32, %c0_i32_0 : i32, i32
  }
  func.func @transform_4(%arg0: i32) -> (i32, i32) {
    %c0_i32 = arith.constant 0 : i32
    %c0_i32_0 = arith.constant 0 : i32
    %c0_i32_1 = arith.constant 0 : i32
    return %c0_i32, %c0_i32_0 : i32, i32
  }
  func.func @transform_5(%arg0: i32) -> (i32, i32, i32) {
    %c0_i32 = arith.constant 0 : i32
    %c0_i32_0 = arith.constant 0 : i32
    %c0_i32_1 = arith.constant 0 : i32
    %c0_i32_2 = arith.constant 0 : i32
    return %c0_i32, %c0_i32_0, %c0_i32_1 : i32, i32, i32
  }
  func.func @transform_6(%arg0: i32) -> (i32, i32) {
    %c0_i32 = arith.constant 0 : i32
    %c0_i32_0 = arith.constant 0 : i32
    return %arg0, %c0_i32 : i32, i32
  }
}

</mosaic_0001>

<llo_original>
// kernel: tpu_custom_call.1
$region0: #{tpu_custom_call.1}
  #allocation0 [shape = 'u32[]', space=smem, size = 0x4, offset = 0x4, fixed_abs, tag = 'smem constant byte address 0x4 - core index']
  #allocation1 [shape = 'u32[144,128]{1,0:T(1,128)}', space=vmem, size = 0x12000, scoped, tag = 'internal scratch']
  #allocation2 [shape = 'bf16[8,32]{1,0:T(8,128)(2,1)}', space=vmem, size = 0x800, scoped, tag = 'scratch operand']
  %s0 = inlined_call_operand.hbm [shape: bf16[16,32], index: 0, kind: input, shape index: {}]
  %s1 = inlined_call_operand.hbm [shape: bf16[32,96], index: 1, kind: input, shape index: {}]
  %s2 = inlined_call_operand.vmem [shape: f32[1,96], index: 2, kind: input, shape index: {}]
  %s3 = inlined_call_operand.hbm [shape: bf16[32,32], index: 3, kind: input, shape index: {}]
  %s4 = inlined_call_operand.vmem [shape: f32[1,32], index: 4, kind: input, shape index: {}]
  %s5 = inlined_call_operand.hbm [shape: bf16[4,8,8], index: 5, kind: input, shape index: {}]
  %s6 = inlined_call_operand.hbm [shape: bf16[16,32], index: 6, kind: output, shape index: {}]
  %s7 = sld [smem:[#allocation0]]
  $region73: #{tpu_custom_call.1} parent=0
    _
  %s9 = ssub.s32 1, %s7
  %s10 = scalar_select 0, %s9, %s7
  $region1: #{tpu_custom_call.1} parent=0
    #allocation3 [shape = 'u8[4096]{0}', space=vmem, size = 0x1000, scoped, tag = 'input window, operand 0']
    #allocation4 [shape = 's32[2]{0}', space=sflag, size = 0x8, scoped, tag = 'scoped memory for tpu_custom_call.1']
    #allocation5 [shape = 's32[2]{0}', space=sflag, size = 0x8, scoped, tag = 'scoped memory for tpu_custom_call.1']
    #allocation6 [shape = 'u8[8192]{0}', space=vmem, size = 0x2000, scoped, tag = 'input window, operand 1, single buffered']
    #allocation7 [shape = 's32[1]{0}', space=sflag, size = 0x4, scoped, tag = 'scoped memory for tpu_custom_call.1']
    #allocation8 [shape = 'u8[8192]{0}', space=vmem, size = 0x2000, scoped, tag = 'input window, operand 3, single buffered']
    #allocation9 [shape = 'u8[8192]{0}', space=vmem, size = 0x2000, scoped, tag = 'input window, operand 5, single buffered']
    #allocation10 [shape = 's32[1]{0}', space=sflag, size = 0x4, scoped, tag = 'scoped memory for tpu_custom_call.1']
    #allocation11 [shape = 'u8[4096]{0}', space=vmem, size = 0x1000, scoped, tag = 'output window, operand 0']
    %11 = vsyncpa [#allocation4], 0
    %s12 = scalar_lea.sflag [#allocation4], 1
    %13 = vsyncpa %s12, 0
    %14 = vsyncpa [#allocation7], 0
    %15 = vsyncpa [#allocation10], 0
    %16 = vsyncpa [#allocation5], 0
    %s17 = scalar_lea.sflag [#allocation5], 1
    %18 = vsyncpa %s17, 0
    loop: start=0, step=1, limit=4
    $region2: #{tpu_custom_call.1} parent=1 // loop_pre_header
      _
    $region3: #{tpu_custom_call.1} parent=1 // loop_header
      %s20 = sphi 0, %s24
      %p21 = scmp.ge.s32.totalorder %s20, 4
      %s30 = sphi 0, %s32
      %s33 = sphi 0, %s30
      %s34 = sphi 0, %s33
      %s50 = sphi 0, %s34
      %s54 = sphi 0, %s54
      %s56 = sphi 0, %s54
      %s57 = sphi 0, %s56
      %s71 = sphi 0, %s57
      %s75 = sphi 0, %s75
      %s77 = sphi 0, %s75
      %s78 = sphi 0, %s77
      %s92 = sphi 0, %s78
      %s96 = sphi 0, %s96
      %s98 = sphi 0, %s96
      %s99 = sphi 0, %s98
      %s113 = sphi 0, %s99
      %s117 = sphi 0, %s117
      %s119 = sphi 0, %s117
      %s120 = sphi 0, %s119
      %s134 = sphi 0, %s120
      %s138 = sphi 0, %s138
      %s140 = sphi 0, %s138
      %s141 = sphi 0, %s140
      %s155 = sphi 0, %s141
      %s161 = sphi 0, %s163
      %s164 = sphi 0, %s161
      %s165 = sphi 0, %s164
      %s181 = sphi 0, %s165
    $region4: #{tpu_custom_call.1} parent=1 // loop_header_branch
      %23 = sbr.rel (%p21) target = $region8
    $region5: #{tpu_custom_call.1} parent=1 // loop_body
      %s25 = ssub.s32 %s20, 1
      %s26 = ssub.s32 %s20, 2
      %s27 = sadd.s32 %s20, 1
      %s28 = ssub.s32 %s20, %s27
      %p29 = scmp.eq.s32.totalorder %s28, 0
      %s31 = sadd.s32 %s30, 1
      %s32 = scalar_select %p29, %s30, %s31
      %p35 = pneg %p29
      %p36 = scmp.eq.s32.totalorder %s20, 1
      %p37 = por %p35, %p36
      %p38 = scmp.ne.s32.totalorder %s30, %s33
      %p39 = scmp.eq.s32.totalorder %s20, 0
      %p40 = por %p38, %p39
      %p41 = scmp.ne.s32.totalorder %s30, %s33
      %p42 = scmp.eq.s32.totalorder %s25, 1
      %p43 = por %p41, %p42
      %p44 = scmp.ne.s32.totalorder %s33, %s34
      %p45 = scmp.eq.s32.totalorder %s25, 0
      %p46 = por %p44, %p45
      %p47 = scmp.ne.s32.totalorder %s33, %s34
      %p48 = scmp.eq.s32.totalorder %s26, 1
      %p49 = por %p47, %p48
      %p51 = scmp.ne.s32.totalorder %s34, %s50
      %p52 = scmp.eq.s32.totalorder %s26, 0
      %p53 = por %p51, %p52
      %s55 = sadd.s32 %s54, 1
      %p58 = scmp.eq.s32.totalorder %s20, 1
      %p59 = scmp.ne.s32.totalorder %s54, %s56
      %p60 = scmp.eq.s32.totalorder %s20, 0
      %p61 = por %p59, %p60
      %p62 = scmp.ne.s32.totalorder %s54, %s56
      %p63 = scmp.eq.s32.totalorder %s25, 1
      %p64 = por %p62, %p63
      %p65 = scmp.ne.s32.totalorder %s56, %s57
      %p66 = scmp.eq.s32.totalorder %s25, 0
      %p67 = por %p65, %p66
      %p68 = scmp.ne.s32.totalorder %s56, %s57
      %p69 = scmp.eq.s32.totalorder %s26, 1
      %p70 = por %p68, %p69
      %p72 = scmp.ne.s32.totalorder %s57, %s71
      %p73 = scmp.eq.s32.totalorder %s26, 0
      %p74 = por %p72, %p73
      %s76 = sadd.s32 %s75, 1
      %p79 = scmp.eq.s32.totalorder %s20, 1
      %p80 = scmp.ne.s32.totalorder %s75, %s77
      %p81 = scmp.eq.s32.totalorder %s20, 0
      %p82 = por %p80, %p81
      %p83 = scmp.ne.s32.totalorder %s75, %s77
      %p84 = scmp.eq.s32.totalorder %s25, 1
      %p85 = por %p83, %p84
      %p86 = scmp.ne.s32.totalorder %s77, %s78
      %p87 = scmp.eq.s32.totalorder %s25, 0
      %p88 = por %p86, %p87
      %p89 = scmp.ne.s32.totalorder %s77, %s78
      %p90 = scmp.eq.s32.totalorder %s26, 1
      %p91 = por %p89, %p90
      %p93 = scmp.ne.s32.totalorder %s78, %s92
      %p94 = scmp.eq.s32.totalorder %s26, 0
      %p95 = por %p93, %p94
      %s97 = sadd.s32 %s96, 1
      %p100 = scmp.eq.s32.totalorder %s20, 1
      %p101 = scmp.ne.s32.totalorder %s96, %s98
      %p102 = scmp.eq.s32.totalorder %s20, 0
      %p103 = por %p101, %p102
      %p104 = scmp.ne.s32.totalorder %s96, %s98
      %p105 = scmp.eq.s32.totalorder %s25, 1
      %p106 = por %p104, %p105
      %p107 = scmp.ne.s32.totalorder %s98, %s99
      %p108 = scmp.eq.s32.totalorder %s25, 0
      %p109 = por %p107, %p108
      %p110 = scmp.ne.s32.totalorder %s98, %s99
      %p111 = scmp.eq.s32.totalorder %s26, 1
      %p112 = por %p110, %p111
      %p114 = scmp.ne.s32.totalorder %s99, %s113
      %p115 = scmp.eq.s32.totalorder %s26, 0
      %p116 = por %p114, %p115
      %s118 = sadd.s32 %s117, 1
      %p121 = scmp.eq.s32.totalorder %s20, 1
      %p122 = scmp.ne.s32.totalorder %s117, %s119
      %p123 = scmp.eq.s32.totalorder %s20, 0
      %p124 = por %p122, %p123
      %p125 = scmp.ne.s32.totalorder %s117, %s119
      %p126 = scmp.eq.s32.totalorder %s25, 1
      %p127 = por %p125, %p126
      %p128 = scmp.ne.s32.totalorder %s119, %s120
      %p129 = scmp.eq.s32.totalorder %s25, 0
      %p130 = por %p128, %p129
      %p131 = scmp.ne.s32.totalorder %s119, %s120
      %p132 = scmp.eq.s32.totalorder %s26, 1
      %p133 = por %p131, %p132
      %p135 = scmp.ne.s32.totalorder %s120, %s134
      %p136 = scmp.eq.s32.totalorder %s26, 0
      %p137 = por %p135, %p136
      %s139 = sadd.s32 %s138, 1
      %p142 = scmp.eq.s32.totalorder %s20, 1
      %p143 = scmp.ne.s32.totalorder %s138, %s140
      %p144 = scmp.eq.s32.totalorder %s20, 0
      %p145 = por %p143, %p144
      %p146 = scmp.ne.s32.totalorder %s138, %s140
      %p147 = scmp.eq.s32.totalorder %s25, 1
      %p148 = por %p146, %p147
      %p149 = scmp.ne.s32.totalorder %s140, %s141
      %p150 = scmp.eq.s32.totalorder %s25, 0
      %p151 = por %p149, %p150
      %p152 = scmp.ne.s32.totalorder %s140, %s141
      %p153 = scmp.eq.s32.totalorder %s26, 1
      %p154 = por %p152, %p153
      %p156 = scmp.ne.s32.totalorder %s141, %s155
      %p157 = scmp.eq.s32.totalorder %s26, 0
      %p158 = por %p156, %p157
      %s159 = ssub.s32 %s20, %s27
      %p160 = scmp.eq.s32.totalorder %s159, 0
      %s162 = sadd.s32 %s161, 1
      %s163 = scalar_select %p160, %s161, %s162
      %p166 = pneg %p160
      %p167 = scmp.eq.s32.totalorder %s20, 1
      %p168 = por %p166, %p167
      %p169 = scmp.ne.s32.totalorder %s161, %s164
      %p170 = scmp.eq.s32.totalorder %s20, 0
      %p171 = por %p169, %p170
      %p172 = scmp.ne.s32.totalorder %s161, %s164
      %p173 = scmp.eq.s32.totalorder %s25, 1
      %p174 = por %p172, %p173
      %p175 = scmp.ne.s32.totalorder %s164, %s165
      %p176 = scmp.eq.s32.totalorder %s25, 0
      %p177 = por %p175, %p176
      %p178 = scmp.ne.s32.totalorder %s164, %s165
      %p179 = scmp.eq.s32.totalorder %s26, 1
      %p180 = por %p178, %p179
      %p182 = scmp.ne.s32.totalorder %s165, %s181
      %p183 = scmp.eq.s32.totalorder %s26, 0
      %p184 = por %p182, %p183
      %p185 = scmp.le.s32.totalorder 1, %s20
      %p186 = scmp.lt.s32.totalorder %s20, 3
      %p187 = pnand %p185, %p186
      %p188 = pneg %p187
      // Predicated region
      $region9: #{tpu_custom_call.1} parent=5 // pred_check
        _
      $region10: #{tpu_custom_call.1} parent=5 // pred_check_branch
        %190 = sbr.rel (%p187) target = $region12
      $region11: #{tpu_custom_call.1} parent=5 // pred_region
        %s191 = ssub.s32 %s20, 1
        // Predicated region
        $region13: #{tpu_custom_call.1} parent=11 // pred_check
          %p192 = pneg %p67
        $region14: #{tpu_custom_call.1} parent=11 // pred_check_branch
          %194 = sbr.rel (%p192) target = $region16
        $region15: #{tpu_custom_call.1} parent=11 // pred_region
          %s196 = ssub.s32 256, 256
          %197 = vsyncadd [#allocation7], %s196
          %s198 = sshll.u32 [#allocation6], 4
          %s199 = int_to_ptr.vmem [resolvable:$true] %s198
          %204 = dma.hbm_to_vmem [thread:$0]  %s1, 256, %s199, [#allocation7], 64, 64, 4
        $region16: #{tpu_custom_call.1} parent=11 // pred_fallthru
          _
        // Predicated region
        $region17: #{tpu_custom_call.1} parent=11 // pred_check
          %p205 = pneg %p88
        $region18: #{tpu_custom_call.1} parent=11 // pred_check_branch
          %207 = sbr.rel (%p205) target = $region20
        $region19: #{tpu_custom_call.1} parent=11 // pred_region
          _
        $region20: #{tpu_custom_call.1} parent=11 // pred_fallthru
          _
        // Predicated region
        $region21: #{tpu_custom_call.1} parent=11 // pred_check
          %p208 = pneg %p109
        $region22: #{tpu_custom_call.1} parent=11 // pred_check_branch
          %210 = sbr.rel (%p208) target = $region24
        $region23: #{tpu_custom_call.1} parent=11 // pred_region
          %s212 = ssub.s32 256, 256
          %213 = vsyncadd [#allocation7], %s212
          %s214 = sshll.u32 [#allocation8], 4
          %s215 = int_to_ptr.vmem [resolvable:$true] %s214
          %220 = dma.hbm_to_vmem [thread:$0]  %s3, 256, %s215, [#allocation7], 64, 64, 4
        $region24: #{tpu_custom_call.1} parent=11 // pred_fallthru
          _
        // Predicated region
        $region25: #{tpu_custom_call.1} parent=11 // pred_check
          %p221 = pneg %p130
        $region26: #{tpu_custom_call.1} parent=11 // pred_check_branch
          %223 = sbr.rel (%p221) target = $region28
        $region27: #{tpu_custom_call.1} parent=11 // pred_region
          _
        $region28: #{tpu_custom_call.1} parent=11 // pred_fallthru
          _
        // Predicated region
        $region29: #{tpu_custom_call.1} parent=11 // pred_check
          %p224 = pneg %p151
        $region30: #{tpu_custom_call.1} parent=11 // pred_check_branch
          %226 = sbr.rel (%p224) target = $region32
        $region31: #{tpu_custom_call.1} parent=11 // pred_region
          %s228 = ssub.s32 256, 256
          %229 = vsyncadd [#allocation10], %s228
          %s230 = sshll.u32 [#allocation9], 4
          %s231 = int_to_ptr.vmem [resolvable:$true] %s230
          %236 = dma.hbm_to_vmem [thread:$0]  %s5, 256, %s231, [#allocation10], 64, 64, 4
        $region32: #{tpu_custom_call.1} parent=11 // pred_fallthru
          _
      $region12: #{tpu_custom_call.1} parent=5 // pred_fallthru
        _
      %p237 = scmp.lt.s32.totalorder %s20, 2
      // Predicated region
      $region33: #{tpu_custom_call.1} parent=5 // pred_check
        %p238 = pneg %p237
      $region34: #{tpu_custom_call.1} parent=5 // pred_check_branch
        %240 = sbr.rel (%p238) target = $region36
      $region35: #{tpu_custom_call.1} parent=5 // pred_region
        // Predicated region
        $region37: #{tpu_custom_call.1} parent=35 // pred_check
          %p241 = pneg %p40
        $region38: #{tpu_custom_call.1} parent=35 // pred_check_branch
          %243 = sbr.rel (%p241) target = $region40
        $region39: #{tpu_custom_call.1} parent=35 // pred_region
          %s244 = sand.u32 %s30, 1
          %s245 = scalar_lea.sflag [#allocation4], %s244
          %s246 = sand.u32 %s30, 1
          %s247 = smul.addr %s246, 4
          %s248 = scalar_lea.vmem [#allocation3], %s247
          %s250 = ssub.s32 64, 64
          %251 = vsyncadd %s245, %s250
          %s252 = smul.addr %s20, 64
          %s253 = scalar_lea.hbm %s0, %s252
          %s255 = sshll.u32 %s248, 4
          %s256 = int_to_ptr.vmem [resolvable:$true] %s255
          %258 = dma.hbm_to_vmem [thread:$0]  %s253, 64, %s256, %s245
        $region40: #{tpu_custom_call.1} parent=35 // pred_fallthru
          _
      $region36: #{tpu_custom_call.1} parent=5 // pred_fallthru
        _
      %p259 = scmp.le.s32.totalorder 1, %s20
      %p260 = scmp.lt.s32.totalorder %s20, 3
      %p261 = pnand %p259, %p260
      %p262 = pneg %p261
      // Predicated region
      $region41: #{tpu_custom_call.1} parent=5 // pred_check
        _
      $region42: #{tpu_custom_call.1} parent=5 // pred_check_branch
        %264 = sbr.rel (%p261) target = $region44
      $region43: #{tpu_custom_call.1} parent=5 // pred_region
        %s265 = ssub.s32 %s20, 1
        %s266 = sand.u32 %s33, 1
        %s267 = scalar_lea.sflag [#allocation4], %s266
        %s268 = sand.u32 %s33, 1
        %s269 = smul.addr %s268, 4
        %s270 = scalar_lea.vmem [#allocation3], %s269
        // Predicated region
        $region45: #{tpu_custom_call.1} parent=43 // pred_check
          %p271 = pneg %p46
        $region46: #{tpu_custom_call.1} parent=43 // pred_check_branch
          %273 = sbr.rel (%p271) target = $region48
        $region47: #{tpu_custom_call.1} parent=43 // pred_region
          %274 = dma.done %s267, 64
        $region48: #{tpu_custom_call.1} parent=43 // pred_fallthru
          _
        // Predicated region
        $region49: #{tpu_custom_call.1} parent=43 // pred_check
          %p275 = pneg %p67
        $region50: #{tpu_custom_call.1} parent=43 // pred_check_branch
          %277 = sbr.rel (%p275) target = $region52
        $region51: #{tpu_custom_call.1} parent=43 // pred_region
          %278 = dma.done [#allocation7], 256
        $region52: #{tpu_custom_call.1} parent=43 // pred_fallthru
          _
        // Predicated region
        $region53: #{tpu_custom_call.1} parent=43 // pred_check
          %p279 = pneg %p109
        $region54: #{tpu_custom_call.1} parent=43 // pred_check_branch
          %281 = sbr.rel (%p279) target = $region56
        $region55: #{tpu_custom_call.1} parent=43 // pred_region
          %282 = dma.done [#allocation7], 256
        $region56: #{tpu_custom_call.1} parent=43 // pred_fallthru
          _
        // Predicated region
        $region57: #{tpu_custom_call.1} parent=43 // pred_check
          %p283 = pneg %p151
        $region58: #{tpu_custom_call.1} parent=43 // pred_check_branch
          %285 = sbr.rel (%p283) target = $region60
        $region59: #{tpu_custom_call.1} parent=43 // pred_region
          %286 = dma.done [#allocation10], 256
        $region60: #{tpu_custom_call.1} parent=43 // pred_fallthru
          _
        %s287 = sand.u32 %s33, 1
        %s288 = scalar_lea.sflag [#allocation4], %s287
        %s289 = sand.u32 %s33, 1
        %s290 = smul.addr %s289, 4
        %s291 = scalar_lea.vmem [#allocation3], %s290
        %p292 = pneg %p46
        %p293 = pneg %p43
        %p294 = pneg %p67
        %p295 = pneg %p64
        %p296 = pneg %p88
        %p297 = pneg %p85
        %p298 = pneg %p109
        %p299 = pneg %p106
        %p300 = pneg %p130
        %p301 = pneg %p127
        %p302 = pneg %p151
        %p303 = pneg %p148
        %p304 = pneg %p177
        %p305 = pneg %p174
        %s306 = sand.u32 %s164, 1
        %s307 = scalar_lea.sflag [#allocation5], %s306
        %s308 = sand.u32 %s164, 1
        %s309 = smul.addr %s308, 4
        %s310 = scalar_lea.vmem [#allocation11], %s309
        %v312 = vld [vmem:[%s270] sm:$0xf]
        %v313 = vld [vmem:[#allocation6] sm:$0xf]
        %v314 = vld [vmem:[#allocation6 + $0x4] sm:$0xf]
        %v315 = vld [vmem:[#allocation6 + $0x8] sm:$0xf]
        %v316 = vld [vmem:[#allocation6 + $0xc] sm:$0xf]
        %v317 = vld [vmem:[%s2] sm:$0x1]
        %v319 = vlaneseq
        %v320 = vshrl.u32 %v319, 7
        %v321 = vsub.s32 0, %v320
        %v322 = vrot.slane %v317, %v321
        %v328 = vunpack.c.l.b16 %v313
        %v329 = vunpack.c.l.b16 %v314
        %v330 = vunpack.c.l.b16 %v315
        %v331 = vunpack.c.l.b16 %v316
        %v332 = vpack.c.b16 %v329, %v328
        %v333 = vpack.c.b16 %v331, %v330
        %vm336 = vcmask 261120
        %v338 = vsel %vm336, %v312, 0
        %340 = vmatprep.subr.bf16.mxu0 0
        %341 = vmatpush1.bf16.msra.mxu0 0
        %342 = vmatprep.subr.bf16.mxu0 0
        %343 = vmatpush1.bf16.msra.mxu0 0
        %344 = vmatprep.subr.bf16.mxu0 0
        %345 = vmatpush1.bf16.msra.mxu0 0
        %346 = vmatprep.subr.bf16.mxu0 0
        %347 = vmatpush1.bf16.msra.mxu0 0
        %348 = vmatprep.subr.bf16.mxu0 0
        %349 = vmatpush1.bf16.msra.mxu0 0
        %350 = vmatprep.subr.bf16.mxu0 0
        %351 = vmatpush1.bf16.msra.mxu0 0
        %352 = vmatprep.subr.bf16.mxu0 0
        %353 = vmatpush1.bf16.msra.mxu0 %v333
        %354 = vmatprep.subr.bf16.mxu0 0
        %355 = vmatpush1.bf16.msra.mxu0 %v332
        %356 = vmatprep.subr.bf16.mxu0 0
        %357 = vmatpush2.bf16.msra.mxu0 0
        %358 = vmatprep.subr.bf16.mxu0 0
        %359 = vmatpush2.bf16.msra.mxu0 0
        %360 = vmatprep.subr.bf16.mxu0 0
        %361 = vmatpush2.bf16.msra.mxu0 0
        %362 = vmatprep.subr.bf16.mxu0 0
        %363 = vmatpush2.bf16.msra.mxu0 0
        %364 = vmatprep.subr.bf16.mxu0 0
        %365 = vmatpush2.bf16.msra.mxu0 0
        %366 = vmatprep.subr.bf16.mxu0 0
        %367 = vmatpush2.bf16.msra.mxu0 0
        %368 = vmatprep.subr.bf16.mxu0 0
        %369 = vmatpush2.bf16.msra.mxu0 0
        %370 = vmatprep.subr.bf16.mxu0 0
        %371 = vmatpush2.bf16.msra.mxu0 0
        %372 = vmatprep.mubr.bf16.mxu0 0
        %373 = vmatmul.mubr.bf16.gmra.mxu0 %v338
        %v374 = vpop.f32.mrf.mxu0
        %v375 = vadd.f32 %v322, %v374
        %v376 = vpop.f32.mrf.mxu0
        %v377 = vpop.f32.mrf.mxu0
        %v378 = vpop.f32.mrf.mxu0
        %379 = vdwg.mxu0
        %v380 = vpack.c.bf16 %v375, %v375
        %382 = vrot.lane.b32.xlu0 %v380, 120
        %v383 = vpop.permute.xlu0 %382
        %384 = vrot.lane.b32.xlu0 %v380, 112
        %v385 = vpop.permute.xlu0 %384
        %386 = vrot.lane.b32.xlu0 %v380, 104
        %v387 = vpop.permute.xlu0 %386
        %388 = vrot.lane.b32.xlu0 %v380, 96
        %v389 = vpop.permute.xlu0 %388
        %vm390 = vcmask 64512
        %v392 = vsel %vm390, %v380, 0
        %v395 = vsel %vm390, %v389, 0
        %397 = vmatprep.subr.bf16.mxu0 0
        %398 = vmatpush1.bf16.xpose.msra.mxu0 0
        %399 = vmatprep.subr.bf16.mxu0 0
        %400 = vmatpush1.bf16.xpose.msra.mxu0 0
        %401 = vmatprep.subr.bf16.mxu0 0
        %402 = vmatpush1.bf16.xpose.msra.mxu0 0
        %403 = vmatprep.subr.bf16.mxu0 0
        %404 = vmatpush1.bf16.xpose.msra.mxu0 0
        %405 = vmatprep.subr.bf16.mxu0 0
        %406 = vmatpush1.bf16.xpose.msra.mxu0 0
        %407 = vmatprep.subr.bf16.mxu0 0
        %408 = vmatpush1.bf16.xpose.msra.mxu0 0
        %409 = vmatprep.subr.bf16.mxu0 0
        %410 = vmatpush1.bf16.xpose.msra.mxu0 0
        %411 = vmatprep.subr.bf16.mxu0 0
        %412 = vmatpush1.bf16.xpose.msra.mxu0 %v395
        %413 = vmatprep.subr.bf16.mxu0 0
        %414 = vmatpush2.bf16.xpose.msra.mxu0 0
        %415 = vmatprep.subr.bf16.mxu0 0
        %416 = vmatpush2.bf16.xpose.msra.mxu0 0
        %417 = vmatprep.subr.bf16.mxu0 0
        %418 = vmatpush2.bf16.xpose.msra.mxu0 0
        %419 = vmatprep.subr.bf16.mxu0 0
        %420 = vmatpush2.bf16.xpose.msra.mxu0 0
        %421 = vmatprep.subr.bf16.mxu0 0
        %422 = vmatpush2.bf16.xpose.msra.mxu0 0
        %423 = vmatprep.subr.bf16.mxu0 0
        %424 = vmatpush2.bf16.xpose.msra.mxu0 0
        %425 = vmatprep.subr.bf16.mxu0 0
        %426 = vmatpush2.bf16.xpose.msra.mxu0 0
        %427 = vmatprep.subr.bf16.mxu0 0
        %428 = vmatpush2.bf16.xpose.msra.mxu0 0
        %429 = vmatprep.mubr.bf16.mxu0 0
        %430 = vmatmul.mubr.bf16.gmra.mxu0 %v392
        %v431 = vpop.f32.mrf.mxu0
        %v432 = vadd.f32 0.0, %v431
        %v433 = vpop.f32.mrf.mxu0
        %v434 = vpop.f32.mrf.mxu0
        %v435 = vpop.f32.mrf.mxu0
        %436 = vdwg.mxu0
        %437 = vrot.lane.b32.xlu0 %v383, 96
        %v438 = vpop.permute.xlu0 %437
        %v440 = vsel %vm390, %v383, 0
        %v443 = vsel %vm390, %v438, 0
        %445 = vmatprep.subr.bf16.mxu0 0
        %446 = vmatpush1.bf16.xpose.msra.mxu0 0
        %447 = vmatprep.subr.bf16.mxu0 0
        %448 = vmatpush1.bf16.xpose.msra.mxu0 0
        %449 = vmatprep.subr.bf16.mxu0 0
        %450 = vmatpush1.bf16.xpose.msra.mxu0 0
        %451 = vmatprep.subr.bf16.mxu0 0
        %452 = vmatpush1.bf16.xpose.msra.mxu0 0
        %453 = vmatprep.subr.bf16.mxu0 0
        %454 = vmatpush1.bf16.xpose.msra.mxu0 0
        %455 = vmatprep.subr.bf16.mxu0 0
        %456 = vmatpush1.bf16.xpose.msra.mxu0 0
        %457 = vmatprep.subr.bf16.mxu0 0
        %458 = vmatpush1.bf16.xpose.msra.mxu0 0
        %459 = vmatprep.subr.bf16.mxu0 0
        %460 = vmatpush1.bf16.xpose.msra.mxu0 %v443
        %461 = vmatprep.subr.bf16.mxu0 0
        %462 = vmatpush2.bf16.xpose.msra.mxu0 0
        %463 = vmatprep.subr.bf16.mxu0 0
        %464 = vmatpush2.bf16.xpose.msra.mxu0 0
        %465 = vmatprep.subr.bf16.mxu0 0
        %466 = vmatpush2.bf16.xpose.msra.mxu0 0
        %467 = vmatprep.subr.bf16.mxu0 0
        %468 = vmatpush2.bf16.xpose.msra.mxu0 0
        %469 = vmatprep.subr.bf16.mxu0 0
        %470 = vmatpush2.bf16.xpose.msra.mxu0 0
        %471 = vmatprep.subr.bf16.mxu0 0
        %472 = vmatpush2.bf16.xpose.msra.mxu0 0
        %473 = vmatprep.subr.bf16.mxu0 0
        %474 = vmatpush2.bf16.xpose.msra.mxu0 0
        %475 = vmatprep.subr.bf16.mxu0 0
        %476 = vmatpush2.bf16.xpose.msra.mxu0 0
        %477 = vmatprep.mubr.bf16.mxu0 0
        %478 = vmatmul.mubr.bf16.gmra.mxu0 %v440
        %v479 = vpop.f32.mrf.mxu0
        %v480 = vadd.f32 0.0, %v479
        %v481 = vpop.f32.mrf.mxu0
        %v482 = vpop.f32.mrf.mxu0
        %v483 = vpop.f32.mrf.mxu0
        %484 = vdwg.mxu0
        %485 = vrot.lane.b32.xlu0 %v385, 96
        %v486 = vpop.permute.xlu0 %485
        %v488 = vsel %vm390, %v385, 0
        %v491 = vsel %vm390, %v486, 0
        %493 = vmatprep.subr.bf16.mxu0 0
        %494 = vmatpush1.bf16.xpose.msra.mxu0 0
        %495 = vmatprep.subr.bf16.mxu0 0
        %496 = vmatpush1.bf16.xpose.msra.mxu0 0
        %497 = vmatprep.subr.bf16.mxu0 0
        %498 = vmatpush1.bf16.xpose.msra.mxu0 0
        %499 = vmatprep.subr.bf16.mxu0 0
        %500 = vmatpush1.bf16.xpose.msra.mxu0 0
        %501 = vmatprep.subr.bf16.mxu0 0
        %502 = vmatpush1.bf16.xpose.msra.mxu0 0
        %503 = vmatprep.subr.bf16.mxu0 0
        %504 = vmatpush1.bf16.xpose.msra.mxu0 0
        %505 = vmatprep.subr.bf16.mxu0 0
        %506 = vmatpush1.bf16.xpose.msra.mxu0 0
        %507 = vmatprep.subr.bf16.mxu0 0
        %508 = vmatpush1.bf16.xpose.msra.mxu0 %v491
        %509 = vmatprep.subr.bf16.mxu0 0
        %510 = vmatpush2.bf16.xpose.msra.mxu0 0
        %511 = vmatprep.subr.bf16.mxu0 0
        %512 = vmatpush2.bf16.xpose.msra.mxu0 0
        %513 = vmatprep.subr.bf16.mxu0 0
        %514 = vmatpush2.bf16.xpose.msra.mxu0 0
        %515 = vmatprep.subr.bf16.mxu0 0
        %516 = vmatpush2.bf16.xpose.msra.mxu0 0
        %517 = vmatprep.subr.bf16.mxu0 0
        %518 = vmatpush2.bf16.xpose.msra.mxu0 0
        %519 = vmatprep.subr.bf16.mxu0 0
        %520 = vmatpush2.bf16.xpose.msra.mxu0 0
        %521 = vmatprep.subr.bf16.mxu0 0
        %522 = vmatpush2.bf16.xpose.msra.mxu0 0
        %523 = vmatprep.subr.bf16.mxu0 0
        %524 = vmatpush2.bf16.xpose.msra.mxu0 0
        %525 = vmatprep.mubr.bf16.mxu0 0
        %526 = vmatmul.mubr.bf16.gmra.mxu0 %v488
        %v527 = vpop.f32.mrf.mxu0
        %v528 = vadd.f32 0.0, %v527
        %v529 = vpop.f32.mrf.mxu0
        %v530 = vpop.f32.mrf.mxu0
        %v531 = vpop.f32.mrf.mxu0
        %532 = vdwg.mxu0
        %533 = vrot.lane.b32.xlu0 %v387, 96
        %v534 = vpop.permute.xlu0 %533
        %v536 = vsel %vm390, %v387, 0
        %v539 = vsel %vm390, %v534, 0
        %541 = vmatprep.subr.bf16.mxu0 0
        %542 = vmatpush1.bf16.xpose.msra.mxu0 0
        %543 = vmatprep.subr.bf16.mxu0 0
        %544 = vmatpush1.bf16.xpose.msra.mxu0 0
        %545 = vmatprep.subr.bf16.mxu0 0
        %546 = vmatpush1.bf16.xpose.msra.mxu0 0
        %547 = vmatprep.subr.bf16.mxu0 0
        %548 = vmatpush1.bf16.xpose.msra.mxu0 0
        %549 = vmatprep.subr.bf16.mxu0 0
        %550 = vmatpush1.bf16.xpose.msra.mxu0 0
        %551 = vmatprep.subr.bf16.mxu0 0
        %552 = vmatpush1.bf16.xpose.msra.mxu0 0
        %553 = vmatprep.subr.bf16.mxu0 0
        %554 = vmatpush1.bf16.xpose.msra.mxu0 0
        %555 = vmatprep.subr.bf16.mxu0 0
        %556 = vmatpush1.bf16.xpose.msra.mxu0 %v539
        %557 = vmatprep.subr.bf16.mxu0 0
        %558 = vmatpush2.bf16.xpose.msra.mxu0 0
        %559 = vmatprep.subr.bf16.mxu0 0
        %560 = vmatpush2.bf16.xpose.msra.mxu0 0
        %561 = vmatprep.subr.bf16.mxu0 0
        %562 = vmatpush2.bf16.xpose.msra.mxu0 0
        %563 = vmatprep.subr.bf16.mxu0 0
        %564 = vmatpush2.bf16.xpose.msra.mxu0 0
        %565 = vmatprep.subr.bf16.mxu0 0
        %566 = vmatpush2.bf16.xpose.msra.mxu0 0
        %567 = vmatprep.subr.bf16.mxu0 0
        %568 = vmatpush2.bf16.xpose.msra.mxu0 0
        %569 = vmatprep.subr.bf16.mxu0 0
        %570 = vmatpush2.bf16.xpose.msra.mxu0 0
        %571 = vmatprep.subr.bf16.mxu0 0
        %572 = vmatpush2.bf16.xpose.msra.mxu0 0
        %573 = vmatprep.mubr.bf16.mxu0 0
        %574 = vmatmul.mubr.bf16.gmra.mxu0 %v536
        %v575 = vpop.f32.mrf.mxu0
        %v576 = vadd.f32 0.0, %v575
        %v577 = vpop.f32.mrf.mxu0
        %v578 = vpop.f32.mrf.mxu0
        %v579 = vpop.f32.mrf.mxu0
        %580 = vdwg.mxu0
        %v581 = vld [vmem:[#allocation9] sm:$0xf]
        %v582 = vld [vmem:[#allocation9 + $0x4] sm:$0xf]
        %v583 = vld [vmem:[#allocation9 + $0x8] sm:$0xf]
        %v584 = vld [vmem:[#allocation9 + $0xc] sm:$0xf]
        %v585 = vunpack.c.l.bf16 %v581
        %v586 = vunpack.c.l.bf16 %v582
        %v587 = vunpack.c.l.bf16 %v583
        %v588 = vunpack.c.l.bf16 %v584
        %v589 = vadd.f32 %v432, %v585
        %v590 = vadd.f32 %v480, %v586
        %v591 = vadd.f32 %v528, %v587
        %v592 = vadd.f32 %v576, %v588
        %v593 = vsel %vm390, %v589, -inf
        %594 = vmax.xlane.f32.xlu0 %v593
        %v595 = vpop.xlane.xlu0 %594
        %v596 = vsel %vm390, %v590, -inf
        %597 = vmax.xlane.f32.xlu0 %v596
        %v598 = vpop.xlane.xlu0 %597
        %v599 = vsel %vm390, %v591, -inf
        %600 = vmax.xlane.f32.xlu0 %v599
        %v601 = vpop.xlane.xlu0 %600
        %v602 = vsel %vm390, %v592, -inf
        %603 = vmax.xlane.f32.xlu0 %v602
        %v604 = vpop.xlane.xlu0 %603
        %v605 = vsub.f32 %v589, %v595
        %v606 = vsub.f32 %v590, %v598
        %v607 = vsub.f32 %v591, %v601
        %v608 = vsub.f32 %v592, %v604
        %v609 = vmul.f32 %v605, 1.442695
        %v610 = vpow.pop %v609
        %v611 = vmul.f32 %v606, 1.442695
        %v612 = vpow.pop %v611
        %v613 = vmul.f32 %v607, 1.442695
        %v614 = vpow.pop %v613
        %v615 = vmul.f32 %v608, 1.442695
        %v616 = vpow.pop %v615
        %v617 = vsel %vm390, %v610, 0.0
        %618 = vadd.xlane.f32.xlu0 %v617
        %v619 = vpop.xlane.xlu0 %618
        %v620 = vsel %vm390, %v612, 0.0
        %621 = vadd.xlane.f32.xlu0 %v620
        %v622 = vpop.xlane.xlu0 %621
        %v623 = vsel %vm390, %v614, 0.0
        %624 = vadd.xlane.f32.xlu0 %v623
        %v625 = vpop.xlane.xlu0 %624
        %v626 = vsel %vm390, %v616, 0.0
        %627 = vadd.xlane.f32.xlu0 %v626
        %v628 = vpop.xlane.xlu0 %627
        %v629 = vrcp.pop %v619
        %v630 = vrcp.pop %v622
        %v631 = vrcp.pop %v625
        %v632 = vrcp.pop %v628
        %v633 = vmul.f32 %v610, %v629
        %v634 = vmul.f32 %v612, %v630
        %v635 = vmul.f32 %v614, %v631
        %v636 = vmul.f32 %v616, %v632
        %v637 = vpack.c.bf16 %v633, %v633
        %v638 = vpack.c.bf16 %v634, %v634
        %v639 = vpack.c.bf16 %v635, %v635
        %v640 = vpack.c.bf16 %v636, %v636
        %641 = vrot.lane.b32.xlu0 %v380, 64
        %v642 = vpop.permute.xlu0 %641
        %v644 = vsel %vm390, %v637, 0
        %vm646 = vcmask 1043456
        %v648 = vsel %vm646, %v642, 0
        %650 = vmatprep.subr.bf16.mxu0 0
        %651 = vmatpush1.bf16.msra.mxu0 0
        %652 = vmatprep.subr.bf16.mxu0 0
        %653 = vmatpush1.bf16.msra.mxu0 0
        %654 = vmatprep.subr.bf16.mxu0 0
        %655 = vmatpush1.bf16.msra.mxu0 0
        %656 = vmatprep.subr.bf16.mxu0 0
        %657 = vmatpush1.bf16.msra.mxu0 0
        %658 = vmatprep.subr.bf16.mxu0 0
        %659 = vmatpush1.bf16.msra.mxu0 0
        %660 = vmatprep.subr.bf16.mxu0 0
        %661 = vmatpush1.bf16.msra.mxu0 0
        %662 = vmatprep.subr.bf16.mxu0 0
        %663 = vmatpush1.bf16.msra.mxu0 0
        %664 = vmatprep.subr.bf16.mxu0 0
        %665 = vmatpush1.bf16.msra.mxu0 %v648
        %666 = vmatprep.subr.bf16.mxu0 0
        %667 = vmatpush2.bf16.msra.mxu0 0
        %668 = vmatprep.subr.bf16.mxu0 0
        %669 = vmatpush2.bf16.msra.mxu0 0
        %670 = vmatprep.subr.bf16.mxu0 0
        %671 = vmatpush2.bf16.msra.mxu0 0
        %672 = vmatprep.subr.bf16.mxu0 0
        %673 = vmatpush2.bf16.msra.mxu0 0
        %674 = vmatprep.subr.bf16.mxu0 0
        %675 = vmatpush2.bf16.msra.mxu0 0
        %676 = vmatprep.subr.bf16.mxu0 0
        %677 = vmatpush2.bf16.msra.mxu0 0
        %678 = vmatprep.subr.bf16.mxu0 0
        %679 = vmatpush2.bf16.msra.mxu0 0
        %680 = vmatprep.subr.bf16.mxu0 0
        %681 = vmatpush2.bf16.msra.mxu0 0
        %682 = vmatprep.mubr.bf16.mxu0 0
        %683 = vmatmul.mubr.bf16.gmra.mxu0 %v644
        %v684 = vpop.f32.mrf.mxu0
        %v685 = vadd.f32 0.0, %v684
        %v686 = vpop.f32.mrf.mxu0
        %v687 = vpop.f32.mrf.mxu0
        %v688 = vpop.f32.mrf.mxu0
        %689 = vdwg.mxu0
        %690 = vrot.lane.b32.xlu0 %v383, 64
        %v691 = vpop.permute.xlu0 %690
        %v693 = vsel %vm390, %v638, 0
        %v696 = vsel %vm646, %v691, 0
        %698 = vmatprep.subr.bf16.mxu0 0
        %699 = vmatpush1.bf16.msra.mxu0 0
        %700 = vmatprep.subr.bf16.mxu0 0
        %701 = vmatpush1.bf16.msra.mxu0 0
        %702 = vmatprep.subr.bf16.mxu0 0
        %703 = vmatpush1.bf16.msra.mxu0 0
        %704 = vmatprep.subr.bf16.mxu0 0
        %705 = vmatpush1.bf16.msra.mxu0 0
        %706 = vmatprep.subr.bf16.mxu0 0
        %707 = vmatpush1.bf16.msra.mxu0 0
        %708 = vmatprep.subr.bf16.mxu0 0
        %709 = vmatpush1.bf16.msra.mxu0 0
        %710 = vmatprep.subr.bf16.mxu0 0
        %711 = vmatpush1.bf16.msra.mxu0 0
        %712 = vmatprep.subr.bf16.mxu0 0
        %713 = vmatpush1.bf16.msra.mxu0 %v696
        %714 = vmatprep.subr.bf16.mxu0 0
        %715 = vmatpush2.bf16.msra.mxu0 0
        %716 = vmatprep.subr.bf16.mxu0 0
        %717 = vmatpush2.bf16.msra.mxu0 0
        %718 = vmatprep.subr.bf16.mxu0 0
        %719 = vmatpush2.bf16.msra.mxu0 0
        %720 = vmatprep.subr.bf16.mxu0 0
        %721 = vmatpush2.bf16.msra.mxu0 0
        %722 = vmatprep.subr.bf16.mxu0 0
        %723 = vmatpush2.bf16.msra.mxu0 0
        %724 = vmatprep.subr.bf16.mxu0 0
        %725 = vmatpush2.bf16.msra.mxu0 0
        %726 = vmatprep.subr.bf16.mxu0 0
        %727 = vmatpush2.bf16.msra.mxu0 0
        %728 = vmatprep.subr.bf16.mxu0 0
        %729 = vmatpush2.bf16.msra.mxu0 0
        %730 = vmatprep.mubr.bf16.mxu0 0
        %731 = vmatmul.mubr.bf16.gmra.mxu0 %v693
        %v732 = vpop.f32.mrf.mxu0
        %v733 = vadd.f32 0.0, %v732
        %v734 = vpop.f32.mrf.mxu0
        %v735 = vpop.f32.mrf.mxu0
        %v736 = vpop.f32.mrf.mxu0
        %737 = vdwg.mxu0
        %738 = vrot.lane.b32.xlu0 %v385, 64
        %v739 = vpop.permute.xlu0 %738
        %v741 = vsel %vm390, %v639, 0
        %v744 = vsel %vm646, %v739, 0
        %746 = vmatprep.subr.bf16.mxu0 0
        %747 = vmatpush1.bf16.msra.mxu0 0
        %748 = vmatprep.subr.bf16.mxu0 0
        %749 = vmatpush1.bf16.msra.mxu0 0
        %750 = vmatprep.subr.bf16.mxu0 0
        %751 = vmatpush1.bf16.msra.mxu0 0
        %752 = vmatprep.subr.bf16.mxu0 0
        %753 = vmatpush1.bf16.msra.mxu0 0
        %754 = vmatprep.subr.bf16.mxu0 0
        %755 = vmatpush1.bf16.msra.mxu0 0
        %756 = vmatprep.subr.bf16.mxu0 0
        %757 = vmatpush1.bf16.msra.mxu0 0
        %758 = vmatprep.subr.bf16.mxu0 0
        %759 = vmatpush1.bf16.msra.mxu0 0
        %760 = vmatprep.subr.bf16.mxu0 0
        %761 = vmatpush1.bf16.msra.mxu0 %v744
        %762 = vmatprep.subr.bf16.mxu0 0
        %763 = vmatpush2.bf16.msra.mxu0 0
        %764 = vmatprep.subr.bf16.mxu0 0
        %765 = vmatpush2.bf16.msra.mxu0 0
        %766 = vmatprep.subr.bf16.mxu0 0
        %767 = vmatpush2.bf16.msra.mxu0 0
        %768 = vmatprep.subr.bf16.mxu0 0
        %769 = vmatpush2.bf16.msra.mxu0 0
        %770 = vmatprep.subr.bf16.mxu0 0
        %771 = vmatpush2.bf16.msra.mxu0 0
        %772 = vmatprep.subr.bf16.mxu0 0
        %773 = vmatpush2.bf16.msra.mxu0 0
        %774 = vmatprep.subr.bf16.mxu0 0
        %775 = vmatpush2.bf16.msra.mxu0 0
        %776 = vmatprep.subr.bf16.mxu0 0
        %777 = vmatpush2.bf16.msra.mxu0 0
        %778 = vmatprep.mubr.bf16.mxu0 0
        %779 = vmatmul.mubr.bf16.gmra.mxu0 %v741
        %v780 = vpop.f32.mrf.mxu0
        %v781 = vadd.f32 0.0, %v780
        %v782 = vpop.f32.mrf.mxu0
        %v783 = vpop.f32.mrf.mxu0
        %v784 = vpop.f32.mrf.mxu0
        %785 = vdwg.mxu0
        %786 = vrot.lane.b32.xlu0 %v387, 64
        %v787 = vpop.permute.xlu0 %786
        %v789 = vsel %vm390, %v640, 0
        %v792 = vsel %vm646, %v787, 0
        %794 = vmatprep.subr.bf16.mxu0 0
        %795 = vmatpush1.bf16.msra.mxu0 0
        %796 = vmatprep.subr.bf16.mxu0 0
        %797 = vmatpush1.bf16.msra.mxu0 0
        %798 = vmatprep.subr.bf16.mxu0 0
        %799 = vmatpush1.bf16.msra.mxu0 0
        %800 = vmatprep.subr.bf16.mxu0 0
        %801 = vmatpush1.bf16.msra.mxu0 0
        %802 = vmatprep.subr.bf16.mxu0 0
        %803 = vmatpush1.bf16.msra.mxu0 0
        %804 = vmatprep.subr.bf16.mxu0 0
        %805 = vmatpush1.bf16.msra.mxu0 0
        %806 = vmatprep.subr.bf16.mxu0 0
        %807 = vmatpush1.bf16.msra.mxu0 0
        %808 = vmatprep.subr.bf16.mxu0 0
        %809 = vmatpush1.bf16.msra.mxu0 %v792
        %810 = vmatprep.subr.bf16.mxu0 0
        %811 = vmatpush2.bf16.msra.mxu0 0
        %812 = vmatprep.subr.bf16.mxu0 0
        %813 = vmatpush2.bf16.msra.mxu0 0
        %814 = vmatprep.subr.bf16.mxu0 0
        %815 = vmatpush2.bf16.msra.mxu0 0
        %816 = vmatprep.subr.bf16.mxu0 0
        %817 = vmatpush2.bf16.msra.mxu0 0
        %818 = vmatprep.subr.bf16.mxu0 0
        %819 = vmatpush2.bf16.msra.mxu0 0
        %820 = vmatprep.subr.bf16.mxu0 0
        %821 = vmatpush2.bf16.msra.mxu0 0
        %822 = vmatprep.subr.bf16.mxu0 0
        %823 = vmatpush2.bf16.msra.mxu0 0
        %824 = vmatprep.subr.bf16.mxu0 0
        %825 = vmatpush2.bf16.msra.mxu0 0
        %826 = vmatprep.mubr.bf16.mxu0 0
        %827 = vmatmul.mubr.bf16.gmra.mxu0 %v789
        %v828 = vpop.f32.mrf.mxu0
        %v829 = vadd.f32 0.0, %v828
        %v830 = vpop.f32.mrf.mxu0
        %v831 = vpop.f32.mrf.mxu0
        %v832 = vpop.f32.mrf.mxu0
        %833 = vdwg.mxu0
        %v834 = vpack.c.bf16 %v685, %v685
        %vm835 = vcmask 60416
        %836 = vst.msk [vmem:[#allocation2] sm:$0xf] %vm835, %v834
        %v837 = vpack.c.bf16 %v733, %v733
        %v839 = vunpack.c.l.b16 %v837
        %v840 = vpack.c.b16 %v839, %v839
        %841 = vrot.lane.b32.xlu0 %v840, 8
        %v842 = vpop.permute.xlu0 %841
        %vm844 = vcmask 126016
        %845 = vst.msk [vmem:[#allocation2] sm:$0xf] %vm844, %v842
        %v846 = vpack.c.bf16 %v781, %v781
        %v848 = vunpack.c.l.b16 %v846
        %v849 = vpack.c.b16 %v848, %v848
        %850 = vrot.lane.b32.xlu0 %v849, 16
        %v851 = vpop.permute.xlu0 %850
        %vm853 = vcmask 191616
        %854 = vst.msk [vmem:[#allocation2] sm:$0xf] %vm853, %v851
        %v855 = vpack.c.bf16 %v829, %v829
        %v857 = vunpack.c.l.b16 %v855
        %v858 = vpack.c.b16 %v857, %v857
        %859 = vrot.lane.b32.xlu0 %v858, 24
        %v860 = vpop.permute.xlu0 %859
        %vm862 = vcmask 257216
        %863 = vst.msk [vmem:[#allocation2] sm:$0xf] %vm862, %v860
        %v864 = vld [vmem:[#allocation2] sm:$0xf]
        %v865 = vld [vmem:[#allocation8] sm:$0xf]
        %v866 = vld [vmem:[#allocation8 + $0x4] sm:$0xf]
        %v867 = vld [vmem:[#allocation8 + $0x8] sm:$0xf]
        %v868 = vld [vmem:[#allocation8 + $0xc] sm:$0xf]
        %v869 = vld [vmem:[%s4] sm:$0x1]
        %v871 = vlaneseq
        %v872 = vshrl.u32 %v871, 7
        %v873 = vsub.s32 0, %v872
        %v874 = vrot.slane %v869, %v873
        %v880 = vunpack.c.l.b16 %v865
        %v881 = vunpack.c.l.b16 %v866
        %v882 = vunpack.c.l.b16 %v867
        %v883 = vunpack.c.l.b16 %v868
        %v884 = vpack.c.b16 %v881, %v880
        %v885 = vpack.c.b16 %v883, %v882
        %v889 = vsel %vm336, %v864, 0
        %891 = vmatprep.subr.bf16.mxu0 0
        %892 = vmatpush1.bf16.msra.mxu0 0
        %893 = vmatprep.subr.bf16.mxu0 0
        %894 = vmatpush1.bf16.msra.mxu0 0
        %895 = vmatprep.subr.bf16.mxu0 0
        %896 = vmatpush1.bf16.msra.mxu0 0
        %897 = vmatprep.subr.bf16.mxu0 0
        %898 = vmatpush1.bf16.msra.mxu0 0
        %899 = vmatprep.subr.bf16.mxu0 0
        %900 = vmatpush1.bf16.msra.mxu0 0
        %901 = vmatprep.subr.bf16.mxu0 0
        %902 = vmatpush1.bf16.msra.mxu0 0
        %903 = vmatprep.subr.bf16.mxu0 0
        %904 = vmatpush1.bf16.msra.mxu0 %v885
        %905 = vmatprep.subr.bf16.mxu0 0
        %906 = vmatpush1.bf16.msra.mxu0 %v884
        %907 = vmatprep.subr.bf16.mxu0 0
        %908 = vmatpush2.bf16.msra.mxu0 0
        %909 = vmatprep.subr.bf16.mxu0 0
        %910 = vmatpush2.bf16.msra.mxu0 0
        %911 = vmatprep.subr.bf16.mxu0 0
        %912 = vmatpush2.bf16.msra.mxu0 0
        %913 = vmatprep.subr.bf16.mxu0 0
        %914 = vmatpush2.bf16.msra.mxu0 0
        %915 = vmatprep.subr.bf16.mxu0 0
        %916 = vmatpush2.bf16.msra.mxu0 0
        %917 = vmatprep.subr.bf16.mxu0 0
        %918 = vmatpush2.bf16.msra.mxu0 0
        %919 = vmatprep.subr.bf16.mxu0 0
        %920 = vmatpush2.bf16.msra.mxu0 0
        %921 = vmatprep.subr.bf16.mxu0 0
        %922 = vmatpush2.bf16.msra.mxu0 0
        %923 = vmatprep.mubr.bf16.mxu0 0
        %924 = vmatmul.mubr.bf16.gmra.mxu0 %v889
        %v925 = vpop.f32.mrf.mxu0
        %v926 = vadd.f32 %v874, %v925
        %v927 = vpop.f32.mrf.mxu0
        %v928 = vpop.f32.mrf.mxu0
        %v929 = vpop.f32.mrf.mxu0
        %930 = vdwg.mxu0
        %v931 = vpack.c.bf16 %v926, %v926
        %vm932 = vcmask 257024
        %933 = vst.msk [vmem:[%s310] sm:$0xf] %vm932, %v931
        %s934 = sand.u32 %s164, 1
        %s935 = scalar_lea.sflag [#allocation5], %s934
        %s936 = sand.u32 %s164, 1
        %s937 = smul.addr %s936, 4
        %s938 = scalar_lea.vmem [#allocation11], %s937
        // Predicated region
        $region61: #{tpu_custom_call.1} parent=43 // pred_check
          %p939 = pneg %p174
        $region62: #{tpu_custom_call.1} parent=43 // pred_check_branch
          %941 = sbr.rel (%p939) target = $region64
        $region63: #{tpu_custom_call.1} parent=43 // pred_region
          %s943 = ssub.s32 64, 64
          %944 = vsyncadd %s935, %s943
          %s945 = smul.addr %s25, 64
          %s946 = scalar_lea.hbm %s6, %s945
          %s948 = sshll.u32 %s938, 4
          %s949 = int_to_ptr.vmem [resolvable:$true] %s948
          %951 = dma.vmem_to_hbm [thread:$0]  %s949, 64, %s946, %s935
        $region64: #{tpu_custom_call.1} parent=43 // pred_fallthru
          _
      $region44: #{tpu_custom_call.1} parent=5 // pred_fallthru
        _
      %p952 = scmp.le.s32.totalorder 2, %s20
      // Predicated region
      $region65: #{tpu_custom_call.1} parent=5 // pred_check
        %p953 = pneg %p952
      $region66: #{tpu_custom_call.1} parent=5 // pred_check_branch
        %955 = sbr.rel (%p953) target = $region68
      $region67: #{tpu_custom_call.1} parent=5 // pred_region
        %s956 = ssub.s32 %s20, 2
        // Predicated region
        $region69: #{tpu_custom_call.1} parent=67 // pred_check
          %p957 = pneg %p180
        $region70: #{tpu_custom_call.1} parent=67 // pred_check_branch
          %959 = sbr.rel (%p957) target = $region72
        $region71: #{tpu_custom_call.1} parent=67 // pred_region
          %s960 = sand.u32 %s165, 1
          %s961 = scalar_lea.sflag [#allocation5], %s960
          %s962 = sand.u32 %s165, 1
          %s963 = smul.addr %s962, 4
          %s964 = scalar_lea.vmem [#allocation11], %s963
          %965 = dma.done %s961, 64
        $region72: #{tpu_custom_call.1} parent=67 // pred_fallthru
          _
      $region68: #{tpu_custom_call.1} parent=5 // pred_fallthru
        _
    $region6: #{tpu_custom_call.1} parent=1 // loop_footer
      %s24 = sadd.s32 1, %s20
    $region7: #{tpu_custom_call.1} parent=1 // loop_footer_branch
      %19 = sbr.rel target = $region3
    $region8: #{tpu_custom_call.1} parent=1 // loop_exit
      _
    %966 = vsyncpa [#allocation4], 1
    %s967 = scalar_lea.sflag [#allocation4], 1
    %968 = vsyncpa %s967, 1
    %969 = vsyncpa [#allocation7], 1
    %970 = vsyncpa [#allocation10], 1
    %971 = vsyncpa [#allocation5], 1
    %s972 = scalar_lea.sflag [#allocation5], 1
    %973 = vsyncpa %s972, 1

</llo_original>
